<compile_context>
chip_gen: v6e
topology: v6e:2x2x1
jax: 0.10.0
libtpu: 0.0.40
codegen_flags: <defaults>
</compile_context>

<pallas_src>
import functools

import jax
import jax.numpy as jnp
from jax.experimental import pallas as pl
from jax.experimental.pallas import tpu as pltpu

_LANES = 128       # lane width of the kernel slab (softmax pairs sit on adjacent lanes)
_ROW_TILE = 512    # rows per grid step when tiling (512*128*4B = 256 KiB per buffer)


def _round_up(x, m):
    return (x + m - 1) // m * m


def _concrete_kernel(x_ref, g_ref, o_ref, *, inv_temp):
    # x_ref / g_ref / o_ref: (row_tile, 128) float32 tiles in VMEM.
    z = (x_ref[...] + g_ref[...]) * jnp.float32(inv_temp)

    # Partner logit: the other class of the 2-way categorical is the adjacent
    # lane (even <-> odd).  Two static lane rolls + a parity select.
    left = jnp.roll(z, shift=-1, axis=-1)     # z[i+1] at lane i
    right = jnp.roll(z, shift=1, axis=-1)     # z[i-1] at lane i
    lane = jax.lax.broadcasted_iota(jnp.int32, z.shape, dimension=1)
    z_partner = jnp.where((lane & 1) == 0, left, right)

    # Exact 2-way softmax with a single exp per element.  Numerically safe:
    # exp overflow -> inf -> p == 0, exp underflow -> 0 -> p == 1.
    d = z - z_partner
    o_ref[...] = 1.0 / (1.0 + jnp.exp(-d))


def concrete_forward(alpha, gumbel_noise, temp):
    """softmax((alpha + gumbel_noise) / temp, axis=-1) for alpha, noise: [B, ndim, 2]."""
    assert alpha.shape == gumbel_noise.shape
    B, N, two = alpha.shape
    assert two == 2, "Concrete module is defined over a 2-way categorical"

    total = B * N * 2
    rows = -(-total // _LANES)                 # cdiv: rows of 128 lanes
    if rows > _ROW_TILE:
        rows = _round_up(rows, _ROW_TILE)
        row_tile = _ROW_TILE
    else:
        row_tile = rows                        # single block == full array dims
    padded_total = rows * _LANES

    x = alpha.astype(jnp.float32).reshape(-1)          # free, contiguous reshape
    g = gumbel_noise.astype(jnp.float32).reshape(-1)
    if padded_total != total:
        pad = padded_total - total                     # even -> whole pairs of zeros
        x = jnp.pad(x, (0, pad))
        g = jnp.pad(g, (0, pad))
    x = x.reshape(rows, _LANES)
    g = g.reshape(rows, _LANES)

    out = pl.pallas_call(
        functools.partial(_concrete_kernel, inv_temp=1.0 / float(temp)),
        out_shape=jax.ShapeDtypeStruct((rows, _LANES), jnp.float32),
        grid=(rows // row_tile,),
        in_specs=[
            pl.BlockSpec((row_tile, _LANES), lambda i: (i, 0)),
            pl.BlockSpec((row_tile, _LANES), lambda i: (i, 0)),
        ],
        out_specs=pl.BlockSpec((row_tile, _LANES), lambda i: (i, 0)),
        compiler_params=pltpu.CompilerParams(
            dimension_semantics=("parallel",),
        ),
    )(x, g)

    out = out.reshape(-1)
    if padded_total != total:
        out = out[:total]
    return out.reshape(B, N, 2)


def sample_concrete(alpha, key, temp):
    """Draw Gumbel(0,1) noise (as torch.distributions.Gumbel does) and run the kernel."""
    # TODO(synk): noise is drawn with jax.random instead of the in-kernel TPU PRNG,
    # because pltpu.prng_seed has no CPU/interpret lowering; semantics are identical.
    g = jax.random.gumbel(key, alpha.shape, dtype=jnp.float32)
    return concrete_forward(alpha, g, temp)


if __name__ == "__main__":
    # Module hyper-parameters (from Concrete.__init__): temp, batch_size, ndim.
    temp = 0.5
    batch_size = 2
    ndim = 128

    key = jax.random.PRNGKey(0)
    k_alpha, k_noise = jax.random.split(key)
    alpha = jax.random.normal(k_alpha, (batch_size, ndim, 2), dtype=jnp.float32)
    gumbel = jax.random.gumbel(k_noise, alpha.shape, dtype=jnp.float32)

    out = concrete_forward(alpha, gumbel, temp)
    out = jax.block_until_ready(out)

    # Reference with the identical noise stream.
    ref = jax.nn.softmax((alpha + gumbel) / temp, axis=-1)

    assert out.shape == (batch_size, ndim, 2)
    assert bool(jnp.all(jnp.isfinite(out)))
    assert bool(jnp.all((out >= 0.0) & (out <= 1.0)))
    assert bool(jnp.allclose(out.sum(axis=-1), 1.0, atol=1e-5))
    assert bool(jnp.allclose(out, ref, atol=1e-5, rtol=1e-5))

    print("KERNEL_OK")
</pallas_src>

<mosaic_0001>
module attributes {stable_mosaic.version = 11 : i64} {
  func.func @_concrete_kernel(%arg0: i32, %arg1: memref<4x128xf32, #tpu.memory_space<vmem>>, %arg2: memref<4x128xf32, #tpu.memory_space<vmem>>, %arg3: memref<4x128xf32, #tpu.memory_space<vmem>>) attributes {dimension_semantics = [#tpu.dimension_semantics<parallel>], iteration_bounds = array<i64: 1>, scalar_prefetch = 0 : i64, scratch_operands = 0 : i64, tpu.core_type = #tpu.core_type<tc>, window_params = [{transform_indices = @transform_0, window_bounds = array<i64: 4, 128>}, {transform_indices = @transform_1, window_bounds = array<i64: 4, 128>}, {transform_indices = @transform_2, window_bounds = array<i64: 4, 128>}]} {
    %c0 = arith.constant 0 : index
    %c0_0 = arith.constant 0 : index
    %0 = vector.load %arg1[%c0, %c0_0] : memref<4x128xf32, #tpu.memory_space<vmem>>, vector<4x128xf32>
    %c0_1 = arith.constant 0 : index
    %c0_2 = arith.constant 0 : index
    %1 = vector.load %arg2[%c0_1, %c0_2] : memref<4x128xf32, #tpu.memory_space<vmem>>, vector<4x128xf32>
    %2 = arith.addf %0, %1 : vector<4x128xf32>
    %cst = arith.constant 2.000000e+00 : f32
    %3 = vector.broadcast %cst : f32 to vector<4x128xf32>
    %4 = arith.mulf %2, %3 : vector<4x128xf32>
    %5 = vector.extract_strided_slice %4 {offsets = [0, 1], sizes = [4, 127], strides = [1, 1]} : vector<4x128xf32> to vector<4x127xf32>
    %6 = vector.extract_strided_slice %4 {offsets = [0, 0], sizes = [4, 1], strides = [1, 1]} : vector<4x128xf32> to vector<4x1xf32>
    %7 = tpu.concatenate %5, %6 in 1 : vector<4x127xf32>, vector<4x1xf32> -> vector<4x128xf32>
    %8 = vector.extract_strided_slice %4 {offsets = [0, 127], sizes = [4, 1], strides = [1, 1]} : vector<4x128xf32> to vector<4x1xf32>
    %9 = vector.extract_strided_slice %4 {offsets = [0, 0], sizes = [4, 127], strides = [1, 1]} : vector<4x128xf32> to vector<4x127xf32>
    %10 = tpu.concatenate %8, %9 in 1 : vector<4x1xf32>, vector<4x127xf32> -> vector<4x128xf32>
    %11 = tpu.iota {dimensions = array<i32: 1>} : vector<4x128xi32>
    %c1_i32 = arith.constant 1 : i32
    %12 = vector.broadcast %c1_i32 : i32 to vector<4x128xi32>
    %13 = arith.andi %11, %12 : vector<4x128xi32>
    %c0_i32 = arith.constant 0 : i32
    %14 = vector.broadcast %c0_i32 : i32 to vector<4x128xi32>
    %15 = arith.cmpi eq, %13, %14 : vector<4x128xi32>
    %16 = arith.select %15, %7, %10 : vector<4x128xi1>, vector<4x128xf32>
    %17 = arith.subf %4, %16 : vector<4x128xf32>
    %cst_3 = arith.constant 0.000000e+00 : f32
    %18 = vector.broadcast %cst_3 : f32 to vector<4x128xf32>
    %19 = arith.subf %18, %17 : vector<4x128xf32>
    %20 = math.exp %19 : vector<4x128xf32>
    %cst_4 = arith.constant 1.000000e+00 : f32
    %21 = vector.broadcast %cst_4 : f32 to vector<4x128xf32>
    %22 = arith.addf %21, %20 : vector<4x128xf32>
    %cst_5 = arith.constant 1.000000e+00 : f32
    %23 = vector.broadcast %cst_5 : f32 to vector<4x128xf32>
    %24 = arith.divf %23, %22 : vector<4x128xf32>
    %c0_6 = arith.constant 0 : index
    %c0_7 = arith.constant 0 : index
    %25 = vector.load %arg3[%c0_6, %c0_7] : memref<4x128xf32, #tpu.memory_space<vmem>>, vector<4x128xf32>
    tpu.vector_store %arg3[%c0_6, %c0_7], %24 {strides = array<i32>} : memref<4x128xf32, #tpu.memory_space<vmem>>, vector<4x128xf32>,
    return
  }
  func.func @transform_0(%arg0: i32) -> (i32, i32) {
    %c0_i32 = arith.constant 0 : i32
    %c0_i32_0 = arith.constant 0 : i32
    return %arg0, %c0_i32 : i32, i32
  }
  func.func @transform_1(%arg0: i32) -> (i32, i32) {
    %c0_i32 = arith.constant 0 : i32
    %c0_i32_0 = arith.constant 0 : i32
    return %arg0, %c0_i32 : i32, i32
  }
  func.func @transform_2(%arg0: i32) -> (i32, i32) {
    %c0_i32 = arith.constant 0 : i32
    %c0_i32_0 = arith.constant 0 : i32
    return %arg0, %c0_i32 : i32, i32
  }
}

</mosaic_0001>

<llo_original>
// kernel: tpu_custom_call.1
$region0: #{tpu_custom_call.1}
  #allocation0 [shape = 'u32[]', space=smem, size = 0x4, offset = 0x4, fixed_abs, tag = 'smem constant byte address 0x4 - core index']
  #allocation1 [shape = 'u32[144,128]{1,0:T(1,128)}', space=vmem, size = 0x12000, scoped, tag = 'internal scratch']
  %s0 = inlined_call_operand.hbm [shape: f32[4,128], index: 0, kind: input, shape index: {}]
  %s1 = inlined_call_operand.hbm [shape: f32[4,128], index: 1, kind: input, shape index: {}]
  %s2 = inlined_call_operand.hbm [shape: f32[4,128], index: 2, kind: output, shape index: {}]
  %s3 = sld [smem:[#allocation0]]
  $region26: #{tpu_custom_call.1} parent=0
    _
  %s5 = ssub.s32 1, %s3
  %s6 = scalar_select 0, %s5, %s3
  $region1: #{tpu_custom_call.1} parent=0
    #allocation2 [shape = 'u8[2048]{0}', space=vmem, size = 0x800, scoped, tag = 'input window, operand 0, single buffered']
    #allocation3 [shape = 's32[1]{0}', space=sflag, size = 0x4, scoped, tag = 'scoped memory for tpu_custom_call.1']
    #allocation4 [shape = 's32[1]{0}', space=sflag, size = 0x4, scoped, tag = 'scoped memory for tpu_custom_call.1']
    #allocation5 [shape = 'u8[2048]{0}', space=vmem, size = 0x800, scoped, tag = 'input window, operand 1, single buffered']
    #allocation6 [shape = 's32[1]{0}', space=sflag, size = 0x4, scoped, tag = 'scoped memory for tpu_custom_call.1']
    #allocation7 [shape = 'u8[2048]{0}', space=vmem, size = 0x800, scoped, tag = 'output window, operand 0, single buffered']
    %7 = vsyncpa [#allocation3], 0
    %8 = vsyncpa [#allocation6], 0
    %9 = vsyncpa [#allocation4], 0
    // Predicated region
    $region2: #{tpu_custom_call.1} parent=1 // pred_check
      _
    $region3: #{tpu_custom_call.1} parent=1 // pred_check_branch
      %11 = sbr.rel (0) target = $region5
    $region4: #{tpu_custom_call.1} parent=1 // pred_region
      %s13 = ssub.s32 64, 64
      %14 = vsyncadd [#allocation3], %s13
      %s16 = sshll.u32 [#allocation2], 4
      %s17 = int_to_ptr.vmem [resolvable:$true] %s16
      %19 = dma.hbm_to_vmem [thread:$0]  %s0, 64, %s17, [#allocation3]
    $region5: #{tpu_custom_call.1} parent=1 // pred_fallthru
      _
    // Predicated region
    $region6: #{tpu_custom_call.1} parent=1 // pred_check
      _
    $region7: #{tpu_custom_call.1} parent=1 // pred_check_branch
      %21 = sbr.rel (0) target = $region9
    $region8: #{tpu_custom_call.1} parent=1 // pred_region
      %s23 = ssub.s32 64, 64
      %24 = vsyncadd [#allocation6], %s23
      %s26 = sshll.u32 [#allocation5], 4
      %s27 = int_to_ptr.vmem [resolvable:$true] %s26
      %29 = dma.hbm_to_vmem [thread:$0]  %s1, 64, %s27, [#allocation6]
    $region9: #{tpu_custom_call.1} parent=1 // pred_fallthru
      _
    // Predicated region
    $region10: #{tpu_custom_call.1} parent=1 // pred_check
      _
    $region11: #{tpu_custom_call.1} parent=1 // pred_check_branch
      %31 = sbr.rel (0) target = $region13
    $region12: #{tpu_custom_call.1} parent=1 // pred_region
      %32 = dma.done [#allocation3], 64
    $region13: #{tpu_custom_call.1} parent=1 // pred_fallthru
      _
    // Predicated region
    $region14: #{tpu_custom_call.1} parent=1 // pred_check
      _
    $region15: #{tpu_custom_call.1} parent=1 // pred_check_branch
      %34 = sbr.rel (0) target = $region17
    $region16: #{tpu_custom_call.1} parent=1 // pred_region
      %35 = dma.done [#allocation6], 64
    $region17: #{tpu_custom_call.1} parent=1 // pred_fallthru
      _
    %v36 = vld [vmem:[#allocation2] sm:$0xf]
    %v37 = vld [vmem:[#allocation5] sm:$0xf]
    %v38 = vadd.f32 %v36, %v37
    %v39 = vmul.f32 %v38, 2.0
    %41 = vrot.lane.b32.xlu0 %v39, 127
    %v42 = vpop.permute.xlu0 %41
    %44 = vrot.lane.b32.xlu0 %v39, 1
    %v45 = vpop.permute.xlu0 %44
    %v47 = vlaneseq
    %v48 = vand.u32 %v47, 127
    %v49 = vand.u32 %v48, 1
    %vm50 = vcmp.eq.s32.totalorder %v49, 0
    %v51 = vsel %vm50, %v42, %v45
    %v52 = vsub.f32 %v39, %v51
    %v53 = vsub.f32 0.0, %v52
    %v54 = vmul.f32 %v53, 1.442695
    %v55 = vpow.pop %v54
    %v56 = vadd.f32 %v55, 1.0
    %v57 = vrcp.pop %v56
    %v58 = vmul.f32 1.0, %v57
    %59 = vst [vmem:[#allocation7] sm:$0xf] %v58
    // Predicated region
    $region18: #{tpu_custom_call.1} parent=1 // pred_check
      _
    $region19: #{tpu_custom_call.1} parent=1 // pred_check_branch
      %61 = sbr.rel (0) target = $region21
    $region20: #{tpu_custom_call.1} parent=1 // pred_region
      %s63 = ssub.s32 64, 64
      %64 = vsyncadd [#allocation4], %s63
      %s66 = sshll.u32 [#allocation7], 4
      %s67 = int_to_ptr.vmem [resolvable:$true] %s66
      %69 = dma.vmem_to_hbm [thread:$0]  %s67, 64, %s2, [#allocation4]
    $region21: #{tpu_custom_call.1} parent=1 // pred_fallthru
      _
    // Predicated region
    $region22: #{tpu_custom_call.1} parent=1 // pred_check
      _
    $region23: #{tpu_custom_call.1} parent=1 // pred_check_branch
      %71 = sbr.rel (0) target = $region25
    $region24: #{tpu_custom_call.1} parent=1 // pred_region
      %72 = dma.done [#allocation4], 64
    $region25: #{tpu_custom_call.1} parent=1 // pred_fallthru
      _
    %73 = vsyncpa [#allocation3], 1
    %74 = vsyncpa [#allocation6], 1
    %75 = vsyncpa [#allocation4], 1

</llo_original>
